<compile_context>
chip_gen: v7x
topology: tpu7x:2x2x1
jax: 0.10.0
libtpu: 0.0.40
codegen_flags: <defaults>
</compile_context>

<pallas_src>
import jax
import jax.numpy as jnp
from jax.experimental import pallas as pl
from jax.experimental.pallas import tpu as pltpu


def _gru_fused_kernel(x_ref, hpart_ref, hprev_ref, wih_t_ref, bih_ref, out_ref):
    tb, s, d = x_ref.shape              # (TILE_B, S, D) block
    h = wih_t_ref.shape[1]

    # One MXU-shaped matmul over all TILE_B*S rows; weights arrive pre-transposed (D, H).
    x2 = x_ref[...].reshape(tb * s, d)
    i = jnp.dot(x2, wih_t_ref[...],
                preferred_element_type=jnp.float32) + bih_ref[...]     # (TILE_B*S, H)
    i3 = i.reshape(tb, s, h)

    hh = hpart_ref[...][:, None, :]     # (TILE_B, 1, H) -> broadcast across time (sublane bcast)
    hp = hprev_ref[...][:, None, :]

    g = jax.nn.sigmoid(i3 + hh)         # zt == rt in the reference module
    nt = jnp.tanh((i3 + g) * hh)
    ht = 1.0 - g * nt + g * hp
    out_ref[...] = ht.astype(out_ref.dtype)


def gru_network_forward(x, h_prev, w_ih, b_ih, w_hh, b_hh):
    """x: (B, S, D) float32; h_prev: (B, H) or None; weights as in nn.Linear."""
    B, S, D = x.shape
    H = w_ih.shape[0]
    if h_prev is None:
        # The module sets self.hidden_sz = input_size, so zeros get D columns.
        assert H == D, "h_prev=None requires hidden_size == input_size (as in the PyTorch module)"
        h_prev = jnp.zeros((B, D), dtype=jnp.float32)

    x = x.astype(jnp.float32)
    h_prev = h_prev.astype(jnp.float32)
    w_ih_t = w_ih.astype(jnp.float32).T                  # (D, H): transpose once, outside the kernel
    b_ih2 = b_ih.astype(jnp.float32).reshape(1, H)

    # hh(h_prev) never changes across timesteps -> compute once outside the hot kernel.
    hpart = h_prev @ w_hh.astype(jnp.float32).T + b_hh.astype(jnp.float32)   # (B, H)

    # Tile over whole batches so hpart/h_prev broadcast cleanly inside a tile; at the toy
    # size this collapses to a single grid step (one fused matmul + epilogue).
    tile_b = min(B, max(1, 512 // max(S, 1)))
    while B % tile_b != 0:
        tile_b -= 1
    grid = (B // tile_b,)

    out = pl.pallas_call(
        _gru_fused_kernel,
        out_shape=jax.ShapeDtypeStruct((B, S, H), jnp.float32),
        grid_spec=pltpu.PrefetchScalarGridSpec(
            num_scalar_prefetch=0,
            grid=grid,
            in_specs=[
                pl.BlockSpec((tile_b, S, D), lambda i: (i, 0, 0)),   # x, native (B,S,D) layout
                pl.BlockSpec((tile_b, H), lambda i: (i, 0)),         # hpart (precomputed)
                pl.BlockSpec((tile_b, H), lambda i: (i, 0)),         # h_prev
                pl.BlockSpec((D, H), lambda i: (0, 0)),              # W_ih^T (held resident)
                pl.BlockSpec((1, H), lambda i: (0, 0)),              # b_ih
            ],
            out_specs=pl.BlockSpec((tile_b, S, H), lambda i: (i, 0, 0)),
        ),
        compiler_params=pltpu.CompilerParams(
            dimension_semantics=("parallel",)),   # tiles are independent -> megacore on v7x
    )(x, hpart, h_prev, w_ih_t, b_ih2)

    # TODO(synk): output last dim H=32 < 128 -> masked lane stores are inherent to the
    # (B, S, H) output contract; cannot pack to a lane-dense slab without changing it.
    return out, out[:, -1, :]


def _reference_forward(x, h_prev, w_ih, b_ih, w_hh, b_hh):
    """Pure-JAX replica of the PyTorch forward for verification."""
    B, S, D = x.shape
    if h_prev is None:
        h_prev = jnp.zeros((B, D), dtype=jnp.float32)
    h = h_prev @ w_hh.T + b_hh
    outs = []
    for t in range(S):
        i = x[:, t, :] @ w_ih.T + b_ih
        g = jax.nn.sigmoid(i + h)
        nt = jnp.tanh((i + g) * h)
        ht = 1.0 - g * nt + g * h_prev
        outs.append(ht)
    return jnp.stack(outs, axis=1), outs[-1]


if __name__ == "__main__":
    # small shapes consistent with the module: batch=2, seq=8, input=hidden=32
    B, S, D, H = 2, 8, 32, 32
    key = jax.random.PRNGKey(0)
    k_x, k_h, k_wih, k_bih, k_whh, k_bhh = jax.random.split(key, 6)

    x = jax.random.normal(k_x, (B, S, D), dtype=jnp.float32)
    h_prev = jax.random.normal(k_h, (B, H), dtype=jnp.float32)

    # deterministic nn.Linear-style init (uniform(-1/sqrt(fan_in), 1/sqrt(fan_in)))
    lim_ih = 1.0 / (D ** 0.5)
    lim_hh = 1.0 / (H ** 0.5)
    w_ih = jax.random.uniform(k_wih, (H, D), jnp.float32, -lim_ih, lim_ih)
    b_ih = jax.random.uniform(k_bih, (H,), jnp.float32, -lim_ih, lim_ih)
    w_hh = jax.random.uniform(k_whh, (H, H), jnp.float32, -lim_hh, lim_hh)
    b_hh = jax.random.uniform(k_bhh, (H,), jnp.float32, -lim_hh, lim_hh)

    hidden_seq, h_last = gru_network_forward(x, h_prev, w_ih, b_ih, w_hh, b_hh)
    jax.block_until_ready(hidden_seq)
    jax.block_until_ready(h_last)

    ref_seq, ref_last = _reference_forward(x, h_prev, w_ih, b_ih, w_hh, b_hh)
    assert hidden_seq.shape == (B, S, H) and h_last.shape == (B, H)
    assert jnp.allclose(hidden_seq, ref_seq, atol=1e-5, rtol=1e-5)
    assert jnp.allclose(h_last, ref_last, atol=1e-5, rtol=1e-5)

    # also exercise the h_prev=None path (hidden_size == input_size, as the module requires)
    seq0, last0 = gru_network_forward(x, None, w_ih, b_ih, w_hh, b_hh)
    jax.block_until_ready(seq0)
    ref_seq0, ref_last0 = _reference_forward(x, None, w_ih, b_ih, w_hh, b_hh)
    assert jnp.allclose(seq0, ref_seq0, atol=1e-5, rtol=1e-5)
    assert jnp.allclose(last0, ref_last0, atol=1e-5, rtol=1e-5)

    print("KERNEL_OK")
</pallas_src>

<mosaic_0001>
module attributes {stable_mosaic.version = 11 : i64} {
  func.func @_gru_fused_kernel(%arg0: i32, %arg1: memref<2x8x32xf32, #tpu.memory_space<vmem>>, %arg2: memref<2x32xf32, #tpu.memory_space<vmem>>, %arg3: memref<2x32xf32, #tpu.memory_space<vmem>>, %arg4: memref<32x32xf32, #tpu.memory_space<vmem>>, %arg5: memref<1x32xf32, #tpu.memory_space<vmem>>, %arg6: memref<2x8x32xf32, #tpu.memory_space<vmem>>) attributes {dimension_semantics = [#tpu.dimension_semantics<parallel>], iteration_bounds = array<i64: 1>, scalar_prefetch = 0 : i64, scratch_operands = 0 : i64, tpu.core_type = #tpu.core_type<tc>, window_params = [{transform_indices = @transform_0, window_bounds = array<i64: 2, 8, 32>}, {transform_indices = @transform_1, window_bounds = array<i64: 2, 32>}, {transform_indices = @transform_2, window_bounds = array<i64: 2, 32>}, {pipeline_mode = #tpu.pipeline_mode<synchronous>, transform_indices = @transform_3, window_bounds = array<i64: 32, 32>}, {pipeline_mode = #tpu.pipeline_mode<synchronous>, transform_indices = @transform_4, window_bounds = array<i64: 1, 32>}, {transform_indices = @transform_5, window_bounds = array<i64: 2, 8, 32>}]} {
    %c0 = arith.constant 0 : index
    %c0_0 = arith.constant 0 : index
    %c0_1 = arith.constant 0 : index
    %0 = vector.load %arg1[%c0, %c0_0, %c0_1] : memref<2x8x32xf32, #tpu.memory_space<vmem>>, vector<2x8x32xf32>
    %1 = vector.shape_cast %0 : vector<2x8x32xf32> to vector<16x32xf32>
    %c0_2 = arith.constant 0 : index
    %c0_3 = arith.constant 0 : index
    %2 = vector.load %arg4[%c0_2, %c0_3] : memref<32x32xf32, #tpu.memory_space<vmem>>, vector<32x32xf32>
    %cst = arith.constant dense<0.000000e+00> : vector<16x32xf32>
    %3 = tpu.matmul %1, %2, %cst {dimension_numbers = #tpu.dot_dimension_numbers<[1], [0], [0], [1], [0, 0, 1, 1], [], []>} : vector<16x32xf32>, vector<32x32xf32>, vector<16x32xf32> -> vector<16x32xf32>
    %c0_4 = arith.constant 0 : index
    %c0_5 = arith.constant 0 : index
    %4 = vector.load %arg5[%c0_4, %c0_5] : memref<1x32xf32, #tpu.memory_space<vmem>>, vector<1x32xf32>
    %5 = vector.broadcast %4 : vector<1x32xf32> to vector<16x32xf32>
    %6 = arith.addf %3, %5 : vector<16x32xf32>
    %7 = vector.shape_cast %6 : vector<16x32xf32> to vector<2x8x32xf32>
    %c0_6 = arith.constant 0 : index
    %c0_7 = arith.constant 0 : index
    %8 = vector.load %arg2[%c0_6, %c0_7] : memref<2x32xf32, #tpu.memory_space<vmem>>, vector<2x32xf32>
    %9 = vector.shape_cast %8 : vector<2x32xf32> to vector<2x1x32xf32>
    %c0_8 = arith.constant 0 : index
    %c0_9 = arith.constant 0 : index
    %10 = vector.load %arg3[%c0_8, %c0_9] : memref<2x32xf32, #tpu.memory_space<vmem>>, vector<2x32xf32>
    %11 = vector.shape_cast %10 : vector<2x32xf32> to vector<2x1x32xf32>
    %12 = vector.broadcast %9 : vector<2x1x32xf32> to vector<2x8x32xf32>
    %13 = arith.addf %7, %12 : vector<2x8x32xf32>
    %14 = arith.negf %13 : vector<2x8x32xf32>
    %15 = math.exp %14 : vector<2x8x32xf32>
    %cst_10 = arith.constant 1.000000e+00 : f32
    %16 = vector.broadcast %cst_10 : f32 to vector<2x8x32xf32>
    %17 = arith.addf %16, %15 : vector<2x8x32xf32>
    %18 = arith.divf %16, %17 : vector<2x8x32xf32>
    %19 = arith.addf %7, %18 : vector<2x8x32xf32>
    %20 = vector.broadcast %9 : vector<2x1x32xf32> to vector<2x8x32xf32>
    %21 = arith.mulf %19, %20 : vector<2x8x32xf32>
    %22 = math.tanh %21 : vector<2x8x32xf32>
    %23 = arith.mulf %18, %22 : vector<2x8x32xf32>
    %cst_11 = arith.constant 1.000000e+00 : f32
    %24 = vector.broadcast %cst_11 : f32 to vector<2x8x32xf32>
    %25 = arith.subf %24, %23 : vector<2x8x32xf32>
    %26 = vector.broadcast %11 : vector<2x1x32xf32> to vector<2x8x32xf32>
    %27 = arith.mulf %18, %26 : vector<2x8x32xf32>
    %28 = arith.addf %25, %27 : vector<2x8x32xf32>
    %c0_12 = arith.constant 0 : index
    %c0_13 = arith.constant 0 : index
    %c0_14 = arith.constant 0 : index
    %29 = vector.load %arg6[%c0_12, %c0_13, %c0_14] : memref<2x8x32xf32, #tpu.memory_space<vmem>>, vector<2x8x32xf32>
    tpu.vector_store %arg6[%c0_12, %c0_13, %c0_14], %28 {strides = array<i32>} : memref<2x8x32xf32, #tpu.memory_space<vmem>>, vector<2x8x32xf32>,
    return
  }
  func.func @transform_0(%arg0: i32) -> (i32, i32, i32) {
    %c0_i32 = arith.constant 0 : i32
    %c0_i32_0 = arith.constant 0 : i32
    %c0_i32_1 = arith.constant 0 : i32
    return %arg0, %c0_i32, %c0_i32_0 : i32, i32, i32
  }
  func.func @transform_1(%arg0: i32) -> (i32, i32) {
    %c0_i32 = arith.constant 0 : i32
    %c0_i32_0 = arith.constant 0 : i32
    return %arg0, %c0_i32 : i32, i32
  }
  func.func @transform_2(%arg0: i32) -> (i32, i32) {
    %c0_i32 = arith.constant 0 : i32
    %c0_i32_0 = arith.constant 0 : i32
    return %arg0, %c0_i32 : i32, i32
  }
  func.func @transform_3(%arg0: i32) -> (i32, i32) {
    %c0_i32 = arith.constant 0 : i32
    %c0_i32_0 = arith.constant 0 : i32
    %c0_i32_1 = arith.constant 0 : i32
    return %c0_i32, %c0_i32_0 : i32, i32
  }
  func.func @transform_4(%arg0: i32) -> (i32, i32) {
    %c0_i32 = arith.constant 0 : i32
    %c0_i32_0 = arith.constant 0 : i32
    %c0_i32_1 = arith.constant 0 : i32
    return %c0_i32, %c0_i32_0 : i32, i32
  }
  func.func @transform_5(%arg0: i32) -> (i32, i32, i32) {
    %c0_i32 = arith.constant 0 : i32
    %c0_i32_0 = arith.constant 0 : i32
    %c0_i32_1 = arith.constant 0 : i32
    return %arg0, %c0_i32, %c0_i32_0 : i32, i32, i32
  }
}

</mosaic_0001>

<llo_original>
// kernel: tpu_custom_call.1
$region0: #{tpu_custom_call.1}
  #allocation0 [shape = 'u32[]', space=smem, size = 0x4, offset = 0x4, fixed_abs, tag = 'smem constant byte address 0x4 - core index']
  #allocation1 [shape = 'u32[144,128]{1,0:T(1,128)}', space=vmem, size = 0x12000, scoped, tag = 'internal scratch']
  %s0 = inlined_call_operand.hbm [shape: f32[2,8,32], index: 0, kind: input, shape index: {}]
  %s1 = inlined_call_operand.vmem [shape: f32[2,32], index: 1, kind: input, shape index: {}]
  %s2 = inlined_call_operand.vmem [shape: f32[2,32], index: 2, kind: input, shape index: {}]
  %s3 = inlined_call_operand.hbm [shape: f32[32,32], index: 3, kind: input, shape index: {}]
  %s4 = inlined_call_operand.vmem [shape: f32[1,32], index: 4, kind: input, shape index: {}]
  %s5 = inlined_call_operand.hbm [shape: f32[2,8,32], index: 5, kind: output, shape index: {}]
  %s6 = sld [smem:[#allocation0]]
  $region38: #{tpu_custom_call.1} parent=0
    _
  %s8 = ssub.s32 1, %s6
  %s9 = scalar_select 0, %s8, %s6
  $region1: #{tpu_custom_call.1} parent=0
    #allocation2 [shape = 'u8[8192]{0}', space=vmem, size = 0x2000, scoped, tag = 'input window, operand 0, single buffered']
    #allocation3 [shape = 's32[1]{0}', space=sflag, size = 0x4, scoped, tag = 'scoped memory for tpu_custom_call.1']
    #allocation4 [shape = 's32[1]{0}', space=sflag, size = 0x4, scoped, tag = 'scoped memory for tpu_custom_call.1']
    #allocation5 [shape = 'u8[16384]{0}', space=vmem, size = 0x4000, scoped, tag = 'input window, operand 3, single buffered']
    #allocation6 [shape = 's32[1]{0}', space=sflag, size = 0x4, scoped, tag = 'scoped memory for tpu_custom_call.1']
    #allocation7 [shape = 'u8[8192]{0}', space=vmem, size = 0x2000, scoped, tag = 'output window, operand 0, single buffered']
    %10 = vsyncpa [#allocation3], 0
    %11 = vsyncpa [#allocation6], 0
    %12 = vsyncpa [#allocation4], 0
    // Predicated region
    $region2: #{tpu_custom_call.1} parent=1 // pred_check
      _
    $region3: #{tpu_custom_call.1} parent=1 // pred_check_branch
      %14 = sbr.rel (0) target = $region5
    $region4: #{tpu_custom_call.1} parent=1 // pred_region
      %s16 = ssub.s32 256, 256
      %17 = vsyncadd [#allocation3], %s16
      %s18 = sshll.u32 [#allocation2], 4
      %s19 = int_to_ptr.vmem [resolvable:$true] %s18
      %24 = dma.hbm_to_vmem [thread:$0]  %s0, 256, %s19, [#allocation3], 128, 128, 8
    $region5: #{tpu_custom_call.1} parent=1 // pred_fallthru
      _
    // Predicated region
    $region6: #{tpu_custom_call.1} parent=1 // pred_check
      _
    $region7: #{tpu_custom_call.1} parent=1 // pred_check_branch
      %26 = sbr.rel (0) target = $region9
    $region8: #{tpu_custom_call.1} parent=1 // pred_region
      _
    $region9: #{tpu_custom_call.1} parent=1 // pred_fallthru
      _
    // Predicated region
    $region10: #{tpu_custom_call.1} parent=1 // pred_check
      _
    $region11: #{tpu_custom_call.1} parent=1 // pred_check_branch
      %28 = sbr.rel (0) target = $region13
    $region12: #{tpu_custom_call.1} parent=1 // pred_region
      _
    $region13: #{tpu_custom_call.1} parent=1 // pred_fallthru
      _
    // Predicated region
    $region14: #{tpu_custom_call.1} parent=1 // pred_check
      _
    $region15: #{tpu_custom_call.1} parent=1 // pred_check_branch
      %30 = sbr.rel (0) target = $region17
    $region16: #{tpu_custom_call.1} parent=1 // pred_region
      %s32 = ssub.s32 512, 512
      %33 = vsyncadd [#allocation6], %s32
      %s34 = sshll.u32 [#allocation5], 4
      %s35 = int_to_ptr.vmem [resolvable:$true] %s34
      %40 = dma.hbm_to_vmem [thread:$0]  %s3, 512, %s35, [#allocation6], 128, 128, 8
    $region17: #{tpu_custom_call.1} parent=1 // pred_fallthru
      _
    // Predicated region
    $region18: #{tpu_custom_call.1} parent=1 // pred_check
      _
    $region19: #{tpu_custom_call.1} parent=1 // pred_check_branch
      %42 = sbr.rel (0) target = $region21
    $region20: #{tpu_custom_call.1} parent=1 // pred_region
      _
    $region21: #{tpu_custom_call.1} parent=1 // pred_fallthru
      _
    // Predicated region
    $region22: #{tpu_custom_call.1} parent=1 // pred_check
      _
    $region23: #{tpu_custom_call.1} parent=1 // pred_check_branch
      %44 = sbr.rel (0) target = $region25
    $region24: #{tpu_custom_call.1} parent=1 // pred_region
      %45 = dma.done [#allocation3], 256
    $region25: #{tpu_custom_call.1} parent=1 // pred_fallthru
      _
    // Predicated region
    $region26: #{tpu_custom_call.1} parent=1 // pred_check
      _
    $region27: #{tpu_custom_call.1} parent=1 // pred_check_branch
      %47 = sbr.rel (0) target = $region29
    $region28: #{tpu_custom_call.1} parent=1 // pred_region
      %48 = dma.done [#allocation6], 512
    $region29: #{tpu_custom_call.1} parent=1 // pred_fallthru
      _
    %v49 = vld [vmem:[#allocation2] sm:$0xff]
    %v50 = vld [vmem:[#allocation2 + $0x8] sm:$0xff]
    %v51 = vld [vmem:[#allocation5] sm:$0xff]
    %v52 = vld [vmem:[#allocation5 + $0x8] sm:$0xff]
    %v53 = vld [vmem:[#allocation5 + $0x10] sm:$0xff]
    %v54 = vld [vmem:[#allocation5 + $0x18] sm:$0xff]
    %v55 = vld [vmem:[%s4] sm:$0x1]
    %v57 = vlaneseq
    %v58 = vshrl.u32 %v57, 7
    %v59 = vsub.s32 0, %v58
    %v60 = vrot.slane %v55, %v59
    %vm62 = vcmask 261120
    %v64 = vsel %vm62, %v49, 0
    %v67 = vsel %vm62, %v50, 0
    %69 = vmatprep.subr.mxu0 0.0
    %70 = vmatpush1.msra.mxu0 %v51
    %71 = vmatprep.subr.mxu0 0.0
    %72 = vmatpush1.msra.mxu0 %v52
    %73 = vmatprep.subr.mxu0 0.0
    %74 = vmatpush1.msra.mxu0 %v53
    %75 = vmatprep.subr.mxu0 0.0
    %76 = vmatpush1.msra.mxu0 %v54
    %77 = vmatprep.subr.mxu0 0.0
    %78 = vmatpush1.msra.mxu0 0.0
    %79 = vmatprep.subr.mxu0 0.0
    %80 = vmatpush1.msra.mxu0 0.0
    %81 = vmatprep.subr.mxu0 0.0
    %82 = vmatpush1.msra.mxu0 0.0
    %83 = vmatprep.subr.mxu0 0.0
    %84 = vmatpush1.msra.mxu0 0.0
    %85 = vmatprep.subr.mxu0 0.0
    %86 = vmatpush1.msra.mxu0 0.0
    %87 = vmatprep.subr.mxu0 0.0
    %88 = vmatpush1.msra.mxu0 0.0
    %89 = vmatprep.subr.mxu0 0.0
    %90 = vmatpush1.msra.mxu0 0.0
    %91 = vmatprep.subr.mxu0 0.0
    %92 = vmatpush1.msra.mxu0 0.0
    %93 = vmatprep.subr.mxu0 0.0
    %94 = vmatpush1.msra.mxu0 0.0
    %95 = vmatprep.subr.mxu0 0.0
    %96 = vmatpush1.msra.mxu0 0.0
    %97 = vmatprep.subr.mxu0 0.0
    %98 = vmatpush1.msra.mxu0 0.0
    %99 = vmatprep.subr.mxu0 0.0
    %100 = vmatpush1.msra.mxu0 0.0
    %101 = vmatprep.subr.mxu0 0.0
    %102 = vmatpush1.msra.mxu0 0.0
    %103 = vmatprep.subr.mxu0 0.0
    %104 = vmatpush1.msra.mxu0 0.0
    %105 = vmatprep.subr.mxu0 0.0
    %106 = vmatpush1.msra.mxu0 0.0
    %107 = vmatprep.subr.mxu0 0.0
    %108 = vmatpush1.msra.mxu0 0.0
    %109 = vmatprep.subr.mxu0 0.0
    %110 = vmatpush1.msra.mxu0 0.0
    %111 = vmatprep.subr.mxu0 0.0
    %112 = vmatpush1.msra.mxu0 0.0
    %113 = vmatprep.subr.mxu0 0.0
    %114 = vmatpush1.msra.mxu0 0.0
    %115 = vmatprep.subr.mxu0 0.0
    %116 = vmatpush1.msra.mxu0 0.0
    %117 = vmatprep.subr.mxu0 0.0
    %118 = vmatpush1.msra.mxu0 0.0
    %119 = vmatprep.subr.mxu0 0.0
    %120 = vmatpush1.msra.mxu0 0.0
    %121 = vmatprep.subr.mxu0 0.0
    %122 = vmatpush1.msra.mxu0 0.0
    %123 = vmatprep.subr.mxu0 0.0
    %124 = vmatpush1.msra.mxu0 0.0
    %125 = vmatprep.subr.mxu0 0.0
    %126 = vmatpush1.msra.mxu0 0.0
    %127 = vmatprep.subr.mxu0 0.0
    %128 = vmatpush1.msra.mxu0 0.0
    %129 = vmatprep.subr.mxu0 0.0
    %130 = vmatpush1.msra.mxu0 0.0
    %131 = vmatprep.subr.mxu0 0.0
    %132 = vmatpush1.msra.mxu0 0.0
    %133 = vmatprep.mubr.f32.mxu0 0.0
    %134 = vmatmul.mubr.f32.gmra.mrb[0].mxu0 %v64
    %v135 = vpop.f32.mrb[0].mxu0
    %v136 = vadd.f32 %v60, %v135
    %v137 = vpop.f32.mrb[0].mxu0
    %138 = vmatprep.mubr.f32.mxu0 0.0
    %139 = vmatmul.mubr.f32.gmra.mrb[0].mxu0 %v67
    %v140 = vpop.f32.mrb[0].mxu0
    %v141 = vadd.f32 %v60, %v140
    %v142 = vpop.f32.mrb[0].mxu0
    %143 = vdwg.mxu0
    %v144 = vld [vmem:[%s1] sm:$0x3]
    %v147 = vunpack.c.l.s4 1966171168
    %v148 = vunpack.c.0.s8 %v147
    %v149 = vlaneseq
    %v150 = vshrl.u32 %v149, 7
    %v151 = vsub.s32 %v148, %v150
    %v152 = vrot.slane %v144, %v151
    %v153 = vcombine.high %v152, %v152
    %v155 = vunpack.c.l.s4 1966171168
    %v156 = vunpack.c.0.s8 %v155
    %v157 = vlaneseq
    %v158 = vshrl.u32 %v157, 7
    %v159 = vsub.s32 %v156, %v158
    %v160 = vrot.slane %v152, %v159
    %v162 = vunpack.c.l.s4 1966171168
    %v163 = vunpack.c.0.s8 %v162
    %v164 = vlaneseq
    %v165 = vshrl.u32 %v164, 7
    %v166 = vsub.s32 %v163, %v165
    %v167 = vrot.slane %v153, %v166
    %v168 = vld [vmem:[%s2] sm:$0x3]
    %v171 = vunpack.c.l.s4 1966171168
    %v172 = vunpack.c.0.s8 %v171
    %v173 = vlaneseq
    %v174 = vshrl.u32 %v173, 7
    %v175 = vsub.s32 %v172, %v174
    %v176 = vrot.slane %v168, %v175
    %v177 = vcombine.high %v176, %v176
    %v179 = vunpack.c.l.s4 1966171168
    %v180 = vunpack.c.0.s8 %v179
    %v181 = vlaneseq
    %v182 = vshrl.u32 %v181, 7
    %v183 = vsub.s32 %v180, %v182
    %v184 = vrot.slane %v176, %v183
    %v186 = vunpack.c.l.s4 1966171168
    %v187 = vunpack.c.0.s8 %v186
    %v188 = vlaneseq
    %v189 = vshrl.u32 %v188, 7
    %v190 = vsub.s32 %v187, %v189
    %v191 = vrot.slane %v177, %v190
    %v192 = vlaneseq
    %v193 = vshrl.u32 %v192, 7
    %v194 = vsub.s32 0, %v193
    %v195 = vrot.slane %v160, %v194
    %v196 = vlaneseq
    %v197 = vshrl.u32 %v196, 7
    %v198 = vsub.s32 0, %v197
    %v199 = vrot.slane %v167, %v198
    %v202 = vadd.f32 %v136, %v195
    %v203 = vadd.f32 %v141, %v199
    %v204 = vxor.u32 %v202, 2147483648
    %v205 = vxor.u32 %v203, 2147483648
    %v206 = vmul.f32 %v204, 1.442695
    %v207 = vpow.pop %v206
    %v208 = vmul.f32 %v205, 1.442695
    %v209 = vpow.pop %v208
    %v210 = vadd.f32 %v207, 1.0
    %v211 = vadd.f32 %v209, 1.0
    %v212 = vrcp.pop %v210
    %v213 = vmul.f32 1.0, %v212
    %v214 = vrcp.pop %v211
    %v215 = vmul.f32 1.0, %v214
    %v216 = vadd.f32 %v136, %v213
    %v217 = vadd.f32 %v141, %v215
    %v218 = vmul.f32 %v216, %v195
    %v219 = vmul.f32 %v217, %v199
    %v220 = vtanh.pop %v218
    %v221 = vtanh.pop %v219
    %v222 = vmul.f32 %v213, %v220
    %v223 = vmul.f32 %v215, %v221
    %v224 = vsub.f32 1.0, %v222
    %v225 = vsub.f32 1.0, %v223
    %v226 = vlaneseq
    %v227 = vshrl.u32 %v226, 7
    %v228 = vsub.s32 0, %v227
    %v229 = vrot.slane %v184, %v228
    %v230 = vlaneseq
    %v231 = vshrl.u32 %v230, 7
    %v232 = vsub.s32 0, %v231
    %v233 = vrot.slane %v191, %v232
    %v236 = vmul.f32 %v213, %v229
    %v237 = vmul.f32 %v215, %v233
    %v238 = vadd.f32 %v224, %v236
    %v239 = vadd.f32 %v225, %v237
    %240 = vst.msk [vmem:[#allocation7] sm:$0xff] %vm62, %v238
    %241 = vst.msk [vmem:[#allocation7 + $0x8] sm:$0xff] %vm62, %v239
    // Predicated region
    $region30: #{tpu_custom_call.1} parent=1 // pred_check
      _
    $region31: #{tpu_custom_call.1} parent=1 // pred_check_branch
      %243 = sbr.rel (0) target = $region33
    $region32: #{tpu_custom_call.1} parent=1 // pred_region
      %s245 = ssub.s32 256, 256
      %246 = vsyncadd [#allocation4], %s245
      %s247 = sshll.u32 [#allocation7], 4
      %s248 = int_to_ptr.vmem [resolvable:$true] %s247
      %253 = dma.vmem_to_hbm [thread:$0]  %s248, 256, %s5, [#allocation4], 128, 128, 8
    $region33: #{tpu_custom_call.1} parent=1 // pred_fallthru
      _
    // Predicated region
    $region34: #{tpu_custom_call.1} parent=1 // pred_check
      _
    $region35: #{tpu_custom_call.1} parent=1 // pred_check_branch
      %255 = sbr.rel (0) target = $region37
    $region36: #{tpu_custom_call.1} parent=1 // pred_region
      %256 = dma.done [#allocation4], 256
    $region37: #{tpu_custom_call.1} parent=1 // pred_fallthru
      _
    %257 = vsyncpa [#allocation3], 1
    %258 = vsyncpa [#allocation6], 1
    %259 = vsyncpa [#allocation4], 1

</llo_original>
